<compile_context>
chip_gen: v7x
topology: tpu7x:2x2x1
jax: 0.10.0
libtpu: 0.0.40
codegen_flags: <defaults>
</compile_context>

<pallas_src>
import functools

import numpy as np
import jax
import jax.numpy as jnp
from jax import lax
from jax.experimental import pallas as pl
from jax.experimental.pallas import tpu as pltpu

DELTA_COEF = 0.2       # module default delta
IGNORE_INDEX = 0.0     # module default ignore_index
_LANES = 128
_DEFAULT_TILE_ROWS = 2048   # (2048, 128) f32 = 1 MiB per input per pipeline buffer


def _round_up(x, m):
    return (x + m - 1) // m * m


def _max_kernel(p_ref, t_ref, out_ref, *, ignore_val, rows_total, tile_rows):
    """Pass 1: per-tile max of |pred - target| over valid (non-ignored) elements."""
    tile = pl.program_id(0)
    p = p_ref[...]                                          # (tr, 128) f32
    t = t_ref[...]
    row = lax.broadcasted_iota(jnp.int32, p.shape, 0) + tile * tile_rows
    mask = (row < rows_total) & (t != ignore_val)           # ragged tail + ignore mask
    vd = jnp.where(mask, jnp.abs(p - t), 0.0)
    m = jnp.max(vd, axis=(0, 1), keepdims=True)             # let Mosaic pick reduce order
    # Lane-dense broadcast slab; one unmasked vreg store per tile.
    out_ref[...] = jnp.broadcast_to(m, out_ref.shape)


def _loss_kernel(scal_ref, p_ref, t_ref, out_ref, *, ignore_val, rows_total, tile_rows):
    """Pass 2: per-tile sum of the berHu elementwise loss given the global delta."""
    tile = pl.program_id(0)
    delta = scal_ref[0]        # 0.2 * global max(vd)
    inv_2d = scal_ref[1]       # 1 / (2 * delta)   (exact, computed once in the wrapper)
    delta_sq = scal_ref[2]     # delta ** 2
    p = p_ref[...]
    t = t_ref[...]
    row = lax.broadcasted_iota(jnp.int32, p.shape, 0) + tile * tile_rows
    mask = (row < rows_total) & (t != ignore_val)
    vd = jnp.where(mask, jnp.abs(p - t), 0.0)
    # Fused branch select (PyTorch compares *target* against delta; quirk kept).
    elem = jnp.where(t <= delta, vd, (vd * vd + delta_sq) * inv_2d)
    elem = jnp.where(mask, elem, 0.0)
    s = jnp.sum(elem, axis=(0, 1), keepdims=True)
    out_ref[...] = jnp.broadcast_to(s, out_ref.shape)


def berhu_loss(pred, target, delta=DELTA_COEF, ignore_index=IGNORE_INDEX,
               tile_rows=_DEFAULT_TILE_ROWS):
    """pred, target: same shape, float. Returns the scalar berHu loss (mean reduction)."""
    pred = jnp.asarray(pred, jnp.float32)
    target = jnp.asarray(target, jnp.float32)
    assert pred.shape == target.shape
    n = int(np.prod(pred.shape))

    p_flat = pred.reshape(-1)
    t_flat = target.reshape(-1)
    if n % _LANES != 0:
        # TODO(synk): ragged last row only — pad a single partial row (pad targets are
        # ignore_index, so they contribute nothing to max or sum).
        pad = _LANES - n % _LANES
        p_flat = jnp.pad(p_flat, (0, pad))
        t_flat = jnp.pad(t_flat, (0, pad), constant_values=float(ignore_index))
    rows = p_flat.shape[0] // _LANES
    p2 = p_flat.reshape(rows, _LANES)     # lane-dense (R, 128), free reshape
    t2 = t_flat.reshape(rows, _LANES)

    tr = min(int(tile_rows), _round_up(rows, 8))
    num_tiles = pl.cdiv(rows, tr)

    in_block = pl.BlockSpec((tr, _LANES), lambda i: (i, 0))
    out_block = pl.BlockSpec((1, 8, _LANES), lambda i: (i, 0, 0))
    parallel = pltpu.CompilerParams(dimension_semantics=("parallel",))

    # ---- pass 1: global max of |pred - target| over valid elements -----------------
    part_max = pl.pallas_call(
        functools.partial(_max_kernel, ignore_val=float(ignore_index),
                          rows_total=rows, tile_rows=tr),
        out_shape=jax.ShapeDtypeStruct((num_tiles, 8, _LANES), jnp.float32),
        grid=(num_tiles,),
        in_specs=[in_block, in_block],
        out_specs=out_block,
        compiler_params=parallel,
    )(p2, t2)

    d = jnp.float32(delta) * jnp.max(part_max)            # tiny XLA combine
    # delta == 0 (all ignored / exact match) -> inf/NaN, same as the PyTorch module.
    scalars = jnp.stack([d, 1.0 / (2.0 * d), d * d]).astype(jnp.float32)

    # ---- pass 2: masked berHu sum with the finalized delta --------------------------
    part_sum = pl.pallas_call(
        functools.partial(_loss_kernel, ignore_val=float(ignore_index),
                          rows_total=rows, tile_rows=tr),
        out_shape=jax.ShapeDtypeStruct((num_tiles, 8, _LANES), jnp.float32),
        grid=(num_tiles,),
        in_specs=[pl.BlockSpec(memory_space=pltpu.MemorySpace.SMEM),
                  in_block, in_block],
        out_specs=out_block,
        compiler_params=parallel,
    )(scalars, p2, t2)

    return jnp.sum(part_sum[:, 0, 0]) / jnp.float32(n)    # mean over ALL elements


def _reference(pred, target, delta=DELTA_COEF, ignore_index=IGNORE_INDEX):
    """Pure-JAX reference matching the PyTorch berHuLoss forward."""
    pred = pred.astype(jnp.float32)
    target = target.astype(jnp.float32)
    valid = (target != ignore_index).astype(jnp.float32)
    vd = jnp.abs(pred - target) * valid
    d = delta * jnp.max(vd)
    f_mask = (target <= d).astype(jnp.float32) * valid     # == (1 - gt(target, d)) * valid
    s_mask = (1.0 - f_mask) * valid
    f_delta = vd * f_mask
    s_delta = (vd * vd + d * d) / (2.0 * d) * s_mask
    return jnp.mean(f_delta + s_delta)


if __name__ == "__main__":
    key = jax.random.PRNGKey(0)
    B, C, H, W = 2, 4, 16, 16
    k1, k2, k3 = jax.random.split(key, 3)

    pred = jax.random.normal(k1, (B, C, H, W), dtype=jnp.float32)
    # Depth-like positive targets; ~15% of pixels set to the ignore value (0).
    target = jax.random.uniform(k2, (B, C, H, W), dtype=jnp.float32,
                                minval=0.05, maxval=2.0)
    ign = jax.random.bernoulli(k3, 0.15, (B, C, H, W))
    target = jnp.where(ign, jnp.float32(IGNORE_INDEX), target)

    loss = berhu_loss(pred, target)
    loss = jax.block_until_ready(loss)

    ref = _reference(pred, target)
    assert np.allclose(np.asarray(loss), np.asarray(ref), rtol=1e-5, atol=1e-5), (
        float(loss), float(ref))

    print("KERNEL_OK")
</pallas_src>

<mosaic_0001>
module attributes {stable_mosaic.version = 11 : i64} {
  func.func @_max_kernel(%arg0: i32, %arg1: memref<16x128xf32, #tpu.memory_space<vmem>>, %arg2: memref<16x128xf32, #tpu.memory_space<vmem>>, %arg3: memref<1x8x128xf32, #tpu.memory_space<vmem>>) attributes {dimension_semantics = [#tpu.dimension_semantics<parallel>], iteration_bounds = array<i64: 1>, scalar_prefetch = 0 : i64, scratch_operands = 0 : i64, tpu.core_type = #tpu.core_type<tc>, window_params = [{transform_indices = @transform_0, window_bounds = array<i64: 16, 128>}, {transform_indices = @transform_1, window_bounds = array<i64: 16, 128>}, {transform_indices = @transform_2, window_bounds = array<i64: 1, 8, 128>}]} {
    %c0 = arith.constant 0 : index
    %c0_0 = arith.constant 0 : index
    %0 = vector.load %arg1[%c0, %c0_0] : memref<16x128xf32, #tpu.memory_space<vmem>>, vector<16x128xf32>
    %c0_1 = arith.constant 0 : index
    %c0_2 = arith.constant 0 : index
    %1 = vector.load %arg2[%c0_1, %c0_2] : memref<16x128xf32, #tpu.memory_space<vmem>>, vector<16x128xf32>
    %2 = tpu.iota {dimensions = array<i32: 0>} : vector<16x128xi32>
    %c16_i32 = arith.constant 16 : i32
    %3 = arith.muli %arg0, %c16_i32 : i32
    %4 = vector.broadcast %3 : i32 to vector<16x128xi32>
    %5 = arith.addi %2, %4 : vector<16x128xi32>
    %c16_i32_3 = arith.constant 16 : i32
    %6 = vector.broadcast %c16_i32_3 : i32 to vector<16x128xi32>
    %7 = arith.cmpi slt, %5, %6 : vector<16x128xi32>
    %cst = arith.constant 0.000000e+00 : f32
    %8 = vector.broadcast %cst : f32 to vector<16x128xf32>
    %9 = arith.cmpf one, %1, %8 : vector<16x128xf32>
    %10 = arith.andi %7, %9 : vector<16x128xi1>
    %11 = arith.subf %0, %1 : vector<16x128xf32>
    %12 = math.absf %11 : vector<16x128xf32>
    %cst_4 = arith.constant 0.000000e+00 : f32
    %13 = vector.broadcast %cst_4 : f32 to vector<16x128xf32>
    %14 = arith.select %10, %12, %13 : vector<16x128xi1>, vector<16x128xf32>
    %15 = vector.shape_cast %14 : vector<16x128xf32> to vector<1x16x128xf32>
    %cst_5 = arith.constant dense<0xFF800000> : vector<1xf32>
    %16 = vector.multi_reduction <maximumf>, %15, %cst_5 [1, 2] : vector<1x16x128xf32> to vector<1xf32>
    %17 = vector.shape_cast %16 : vector<1xf32> to vector<1x1x1xf32>
    %18 = vector.extract %17[0, 0, 0] : f32 from vector<1x1x1xf32>
    %19 = vector.broadcast %18 : f32 to vector<1x1xf32>
    %20 = vector.shape_cast %19 : vector<1x1xf32> to vector<1x1x1xf32>
    %21 = vector.broadcast %20 : vector<1x1x1xf32> to vector<1x8x128xf32>
    %c0_6 = arith.constant 0 : index
    %c0_7 = arith.constant 0 : index
    %c0_8 = arith.constant 0 : index
    %22 = vector.load %arg3[%c0_6, %c0_7, %c0_8] : memref<1x8x128xf32, #tpu.memory_space<vmem>>, vector<1x8x128xf32>
    tpu.vector_store %arg3[%c0_6, %c0_7, %c0_8], %21 {strides = array<i32>} : memref<1x8x128xf32, #tpu.memory_space<vmem>>, vector<1x8x128xf32>,
    return
  }
  func.func @transform_0(%arg0: i32) -> (i32, i32) {
    %c0_i32 = arith.constant 0 : i32
    %c0_i32_0 = arith.constant 0 : i32
    return %arg0, %c0_i32 : i32, i32
  }
  func.func @transform_1(%arg0: i32) -> (i32, i32) {
    %c0_i32 = arith.constant 0 : i32
    %c0_i32_0 = arith.constant 0 : i32
    return %arg0, %c0_i32 : i32, i32
  }
  func.func @transform_2(%arg0: i32) -> (i32, i32, i32) {
    %c0_i32 = arith.constant 0 : i32
    %c0_i32_0 = arith.constant 0 : i32
    %c0_i32_1 = arith.constant 0 : i32
    return %arg0, %c0_i32, %c0_i32_0 : i32, i32, i32
  }
}

</mosaic_0001>

<llo_original>
// kernel: tpu_custom_call.1
$region0: #{tpu_custom_call.1}
  #allocation0 [shape = 'u32[]', space=smem, size = 0x4, offset = 0x4, fixed_abs, tag = 'smem constant byte address 0x4 - core index']
  #allocation1 [shape = 'u32[144,128]{1,0:T(1,128)}', space=vmem, size = 0x12000, scoped, tag = 'internal scratch']
  %s0 = inlined_call_operand.hbm [shape: f32[16,128], index: 0, kind: input, shape index: {}]
  %s1 = inlined_call_operand.hbm [shape: f32[16,128], index: 1, kind: input, shape index: {}]
  %s2 = inlined_call_operand.hbm [shape: f32[1,8,128], index: 2, kind: output, shape index: {}]
  %s3 = sld [smem:[#allocation0]]
  $region26: #{tpu_custom_call.1} parent=0
    _
  %s5 = ssub.s32 1, %s3
  %s6 = scalar_select 0, %s5, %s3
  $region1: #{tpu_custom_call.1} parent=0
    #allocation2 [shape = 'u8[8192]{0}', space=vmem, size = 0x2000, scoped, tag = 'input window, operand 0, single buffered']
    #allocation3 [shape = 's32[1]{0}', space=sflag, size = 0x4, scoped, tag = 'scoped memory for tpu_custom_call.1']
    #allocation4 [shape = 's32[1]{0}', space=sflag, size = 0x4, scoped, tag = 'scoped memory for tpu_custom_call.1']
    #allocation5 [shape = 'u8[8192]{0}', space=vmem, size = 0x2000, scoped, tag = 'input window, operand 1, single buffered']
    #allocation6 [shape = 's32[1]{0}', space=sflag, size = 0x4, scoped, tag = 'scoped memory for tpu_custom_call.1']
    #allocation7 [shape = 'u8[4096]{0}', space=vmem, size = 0x1000, scoped, tag = 'output window, operand 0, single buffered']
    %7 = vsyncpa [#allocation3], 0
    %8 = vsyncpa [#allocation6], 0
    %9 = vsyncpa [#allocation4], 0
    // Predicated region
    $region2: #{tpu_custom_call.1} parent=1 // pred_check
      _
    $region3: #{tpu_custom_call.1} parent=1 // pred_check_branch
      %11 = sbr.rel (0) target = $region5
    $region4: #{tpu_custom_call.1} parent=1 // pred_region
      %s13 = ssub.s32 256, 256
      %14 = vsyncadd [#allocation3], %s13
      %s15 = sshll.u32 [#allocation2], 4
      %s16 = int_to_ptr.vmem [resolvable:$true] %s15
      %21 = dma.hbm_to_vmem [thread:$0]  %s0, 256, %s16, [#allocation3], 128, 128, 8
    $region5: #{tpu_custom_call.1} parent=1 // pred_fallthru
      _
    // Predicated region
    $region6: #{tpu_custom_call.1} parent=1 // pred_check
      _
    $region7: #{tpu_custom_call.1} parent=1 // pred_check_branch
      %23 = sbr.rel (0) target = $region9
    $region8: #{tpu_custom_call.1} parent=1 // pred_region
      %s25 = ssub.s32 256, 256
      %26 = vsyncadd [#allocation6], %s25
      %s27 = sshll.u32 [#allocation5], 4
      %s28 = int_to_ptr.vmem [resolvable:$true] %s27
      %33 = dma.hbm_to_vmem [thread:$0]  %s1, 256, %s28, [#allocation6], 128, 128, 8
    $region9: #{tpu_custom_call.1} parent=1 // pred_fallthru
      _
    // Predicated region
    $region10: #{tpu_custom_call.1} parent=1 // pred_check
      _
    $region11: #{tpu_custom_call.1} parent=1 // pred_check_branch
      %35 = sbr.rel (0) target = $region13
    $region12: #{tpu_custom_call.1} parent=1 // pred_region
      %36 = dma.done [#allocation3], 256
    $region13: #{tpu_custom_call.1} parent=1 // pred_fallthru
      _
    // Predicated region
    $region14: #{tpu_custom_call.1} parent=1 // pred_check
      _
    $region15: #{tpu_custom_call.1} parent=1 // pred_check_branch
      %38 = sbr.rel (0) target = $region17
    $region16: #{tpu_custom_call.1} parent=1 // pred_region
      %39 = dma.done [#allocation6], 256
    $region17: #{tpu_custom_call.1} parent=1 // pred_fallthru
      _
    %v40 = vld [vmem:[#allocation2] sm:$0xff]
    %v41 = vld [vmem:[#allocation2 + $0x8] sm:$0xff]
    %v42 = vld [vmem:[#allocation5] sm:$0xff]
    %v43 = vld [vmem:[#allocation5 + $0x8] sm:$0xff]
    %v44 = vlaneseq
    %v45 = vshrl.u32 %v44, 7
    %v46 = vadd.s32 %v45, 8
    %s47 = smul.u32 0, 16
    %v48 = vstv %s47
    %v49 = vadd.s32 %v45, %v48
    %v50 = vadd.s32 %v46, %v48
    %vm51 = vcmp.lt.s32.totalorder %v49, 16
    %vm52 = vcmp.lt.s32.totalorder %v50, 16
    %vm53 = vcmp.ne.f32.partialorder %v42, 0.0
    %vm54 = vcmp.ne.f32.partialorder %v43, 0.0
    %vm55 = vmand %vm51, %vm53
    %vm56 = vmand %vm52, %vm54
    %v57 = vsub.f32 %v40, %v42
    %v58 = vsub.f32 %v41, %v43
    %v59 = vand.u32 2147483647, %v57
    %v60 = vand.u32 2147483647, %v58
    %v61 = vsel %vm55, %v59, 0.0
    %v62 = vsel %vm56, %v60, 0.0
    %v63 = vmax.f32 %v61, %v62
    %64 = vmax.xlane.f32.xlu0 %v63
    %v65 = vpop.xlane.xlu0 %64
    %v66 = vrot.slane %v65, 4
    %v67 = vmax.f32 %v65, %v66
    %v68 = vrot.slane %v67, 2
    %v69 = vmax.f32 %v67, %v68
    %v70 = vrot.slane %v69, 1
    %v71 = vmax.f32 %v69, %v70
    %s72 = vtos %v71
    %v73 = vstv %s72
    %74 = vst [vmem:[#allocation7] sm:$0xff] %v73
    // Predicated region
    $region18: #{tpu_custom_call.1} parent=1 // pred_check
      _
    $region19: #{tpu_custom_call.1} parent=1 // pred_check_branch
      %76 = sbr.rel (0) target = $region21
    $region20: #{tpu_custom_call.1} parent=1 // pred_region
      %s78 = ssub.s32 128, 128
      %79 = vsyncadd [#allocation4], %s78
      %s81 = sshll.u32 [#allocation7], 4
      %s82 = int_to_ptr.vmem [resolvable:$true] %s81
      %84 = dma.vmem_to_hbm [thread:$0]  %s82, 128, %s2, [#allocation4]
    $region21: #{tpu_custom_call.1} parent=1 // pred_fallthru
      _
    // Predicated region
    $region22: #{tpu_custom_call.1} parent=1 // pred_check
      _
    $region23: #{tpu_custom_call.1} parent=1 // pred_check_branch
      %86 = sbr.rel (0) target = $region25
    $region24: #{tpu_custom_call.1} parent=1 // pred_region
      %87 = dma.done [#allocation4], 128
    $region25: #{tpu_custom_call.1} parent=1 // pred_fallthru
      _
    %88 = vsyncpa [#allocation3], 1
    %89 = vsyncpa [#allocation6], 1
    %90 = vsyncpa [#allocation4], 1

</llo_original>
